<compile_context>
chip_gen: v7x
topology: tpu7x:2x2x1
jax: 0.10.0
libtpu: 0.0.40
codegen_flags: <defaults>
</compile_context>

<pallas_src>
import jax
import jax.numpy as jnp
from jax.experimental import pallas as pl
from jax.experimental.pallas import tpu as pltpu

HIDDEN = 3            # fc1 output features (fixed by the module)
LANES = 128
MAX_TILE_R = 8192     # packed rows per grid step (block >= DMA-efficiency plateau)
MIN_GRID = 8          # target minimum grid steps (pipelining + both v7x TensorCores)


def _round_up(x, m):
    return (x + m - 1) // m * m


def _next_pow2(x):
    return 1 << max(0, (x - 1).bit_length())


def mlp_kernel(x_ref, w1_ref, b1_ref, w2_ref, b2_ref, o_ref):
    # x_ref : (TILE_R, 128)  packed samples (S samples * P feature lanes per row)
    # w1_ref: (128, 128)     block-diagonal fc1 weights, compute dtype (VMEM resident)
    # b1_ref: (1, 128)       tiled fc1 bias, f32
    # w2_ref: (128, S)       block-diagonal fc2 weights, compute dtype
    # b2_ref: (1, S)         fc2 bias broadcast, f32
    # o_ref : (TILE_R, S)    packed outputs, f32, lane dense
    x = x_ref[...].astype(w1_ref.dtype)          # cheap VPU cast; MXU runs native dtype
    h = jnp.tanh(
        jnp.dot(x, w1_ref[...], preferred_element_type=jnp.float32) + b1_ref[...]
    )
    y = jnp.dot(h.astype(w2_ref.dtype), w2_ref[...],
                preferred_element_type=jnp.float32) + b2_ref[...]
    o_ref[...] = y.astype(o_ref.dtype)


def mlp_forward(x, w1, b1, w2, b2, *, max_tile_r=MAX_TILE_R,
                compute_dtype=jnp.bfloat16):
    """y = tanh(x @ w1 + b1) @ w2 + b2.

    x: (N, D), w1: (D, 3), b1: (3,), w2: (3, 1), b2: (1,)   (weights in (in, out) layout).
    compute_dtype: dtype of the MXU matmul operands (accumulation is always f32).
                   Use jnp.float32 for exact PyTorch-f32 numerics.
    Returns y: (N, 1) f32.
    """
    n, d = x.shape
    assert d <= LANES, "n_inputs > 128 not supported by the packed layout"

    # Per-sample lane slot width and samples packed per 128-lane row.
    p = max(4, _next_pow2(d))       # >= D, >= HIDDEN, divides 128
    s = LANES // p

    # ---------------- wrapper-side packing (layout plumbing, not compute) --------
    if x.dtype != jnp.bfloat16:     # stream x in the caller's dtype (bf16 passes through)
        x = x.astype(jnp.float32)
    if d != p:                      # feature pad (copy); free when D == slot width
        x = jnp.pad(x, ((0, 0), (0, p - d)))
    n_pad = _round_up(n, s)         # pad ONLY to a multiple of S, and only if needed
    if n_pad != n:
        x = jnp.pad(x, ((0, n_pad - n), (0, 0)))
    r = n_pad // s                  # packed rows
    x_packed = x.reshape(r, LANES)  # free row-major reshape

    # Tile size: aim for >= MIN_GRID grid steps, cap at max_tile_r, keep a multiple of 8.
    # Last block may overhang r; Pallas pads edge blocks and discards overhang outputs.
    max_tile_r = max(8, (max_tile_r // 8) * 8)
    target = pl.cdiv(r, MIN_GRID)
    tile_r = max(8, min(max_tile_r, (target // 8) * 8))
    grid = pl.cdiv(r, tile_r)

    # Block-diagonal weights: one MXU pass processes S samples at once.
    f32 = jnp.float32
    w1p = jnp.zeros((p, p), f32).at[:d, :HIDDEN].set(w1.astype(f32))
    b1p = jnp.zeros((p,), f32).at[:HIDDEN].set(jnp.reshape(b1, (-1,)).astype(f32))
    w2p = jnp.zeros((p, 1), f32).at[:HIDDEN, :].set(w2.astype(f32))
    eye_s = jnp.eye(s, dtype=f32)
    w1_big = jnp.kron(eye_s, w1p).astype(compute_dtype)          # (128, 128)
    b1_big = jnp.tile(b1p, s).reshape(1, LANES)                  # (1, 128) f32
    w2_big = jnp.kron(eye_s, w2p).astype(compute_dtype)          # (128, S)
    b2_big = jnp.broadcast_to(jnp.reshape(b2, (1, 1)).astype(f32), (1, s))

    # Cost of the padded work actually executed (dense MXU tiles, full-lane tanh).
    x_bytes = x_packed.dtype.itemsize
    w_bytes = jnp.dtype(compute_dtype).itemsize
    cost = pl.CostEstimate(
        flops=2 * r * LANES * (LANES + s),
        transcendentals=r * LANES,
        bytes_accessed=(r * LANES * x_bytes                      # x stream
                        + r * s * 4                              # y stream
                        + (LANES * LANES + LANES * s) * w_bytes  # weights
                        + (LANES + s) * 4),                      # biases
    )

    y_packed = pl.pallas_call(
        mlp_kernel,
        out_shape=jax.ShapeDtypeStruct((r, s), jnp.float32),
        grid=(grid,),
        in_specs=[
            pl.BlockSpec((tile_r, LANES), lambda i: (i, 0)),    # x: streamed tiles
            pl.BlockSpec((LANES, LANES), lambda i: (0, 0)),     # w1: VMEM resident
            pl.BlockSpec((1, LANES), lambda i: (0, 0)),         # b1: VMEM resident
            pl.BlockSpec((LANES, s), lambda i: (0, 0)),         # w2: VMEM resident
            pl.BlockSpec((1, s), lambda i: (0, 0)),             # b2: VMEM resident
        ],
        out_specs=pl.BlockSpec((tile_r, s), lambda i: (i, 0)),  # lane-dense output
        compiler_params=pltpu.CompilerParams(
            dimension_semantics=("parallel",),      # shard grid across v7x's 2 TCs
            vmem_limit_bytes=32 * 1024 * 1024,      # required on v5e; safe on v7x's 64 MiB
        ),
        cost_estimate=cost,
    )(x_packed, w1_big, b1_big, w2_big, b2_big)

    # (r, S) row-major == flat sample order; free reshape, then drop the padded tail.
    return y_packed.reshape(n_pad, 1)[:n]


def init_params(key, n_inputs):
    # Mimic nn.Linear's U(-1/sqrt(fan_in), 1/sqrt(fan_in)); weights in (in, out) layout.
    k1, k2, k3, k4 = jax.random.split(key, 4)
    lim1 = 1.0 / jnp.sqrt(jnp.float32(n_inputs))
    lim2 = 1.0 / jnp.sqrt(jnp.float32(HIDDEN))
    w1 = jax.random.uniform(k1, (n_inputs, HIDDEN), jnp.float32, -lim1, lim1)
    b1 = jax.random.uniform(k2, (HIDDEN,), jnp.float32, -lim1, lim1)
    w2 = jax.random.uniform(k3, (HIDDEN, 1), jnp.float32, -lim2, lim2)
    b2 = jax.random.uniform(k4, (1,), jnp.float32, -lim2, lim2)
    return w1, b1, w2, b2


if __name__ == "__main__":
    key = jax.random.PRNGKey(0)
    kx, kp = jax.random.split(key)

    # N not a multiple of the 32-sample packing (exercises the tail pad) and a small tile
    # cap so the multi-step pipelined grid + overhanging edge block are exercised.
    n_samples, n_inputs = 4100, 4
    x = jax.random.normal(kx, (n_samples, n_inputs), jnp.float32)
    w1, b1, w2, b2 = init_params(kp, n_inputs)

    # Reference in plain JAX (same math as the PyTorch forward).
    y_ref = jnp.tanh(x @ w1 + b1) @ w2 + b2

    # Exact-numerics path (f32 matmul operands).
    y_f32 = mlp_forward(x, w1, b1, w2, b2, max_tile_r=32, compute_dtype=jnp.float32)
    jax.block_until_ready(y_f32)
    assert y_f32.shape == (n_samples, 1)
    assert jnp.allclose(y_f32, y_ref, atol=1e-4, rtol=1e-4), "f32 path mismatch"

    # Default fast path (bf16 matmul operands, f32 accumulation / bias / tanh).
    y_fast = mlp_forward(x, w1, b1, w2, b2, max_tile_r=32)
    jax.block_until_ready(y_fast)
    assert y_fast.shape == (n_samples, 1)
    assert jnp.allclose(y_fast, y_ref, atol=5e-2, rtol=5e-2), "bf16 path mismatch"

    print("KERNEL_OK")
</pallas_src>

<mosaic_0001>
module attributes {stable_mosaic.version = 11 : i64} {
  func.func @mlp_kernel(%arg0: i32, %arg1: memref<16x128xf32, #tpu.memory_space<vmem>>, %arg2: memref<128x128xf32, #tpu.memory_space<vmem>>, %arg3: memref<1x128xf32, #tpu.memory_space<vmem>>, %arg4: memref<128x32xf32, #tpu.memory_space<vmem>>, %arg5: memref<1x32xf32, #tpu.memory_space<vmem>>, %arg6: memref<16x32xf32, #tpu.memory_space<vmem>>) attributes {dimension_semantics = [#tpu.dimension_semantics<parallel>], iteration_bounds = array<i64: 9>, scalar_prefetch = 0 : i64, scratch_operands = 0 : i64, tpu.core_type = #tpu.core_type<tc>, window_params = [{transform_indices = @transform_0, window_bounds = array<i64: 16, 128>}, {pipeline_mode = #tpu.pipeline_mode<synchronous>, transform_indices = @transform_1, window_bounds = array<i64: 128, 128>}, {pipeline_mode = #tpu.pipeline_mode<synchronous>, transform_indices = @transform_2, window_bounds = array<i64: 1, 128>}, {pipeline_mode = #tpu.pipeline_mode<synchronous>, transform_indices = @transform_3, window_bounds = array<i64: 128, 32>}, {pipeline_mode = #tpu.pipeline_mode<synchronous>, transform_indices = @transform_4, window_bounds = array<i64: 1, 32>}, {transform_indices = @transform_5, window_bounds = array<i64: 16, 32>}]} {
    %c0 = arith.constant 0 : index
    %c0_0 = arith.constant 0 : index
    %0 = vector.load %arg1[%c0, %c0_0] : memref<16x128xf32, #tpu.memory_space<vmem>>, vector<16x128xf32>
    %c0_1 = arith.constant 0 : index
    %c0_2 = arith.constant 0 : index
    %1 = vector.load %arg2[%c0_1, %c0_2] : memref<128x128xf32, #tpu.memory_space<vmem>>, vector<128x128xf32>
    %cst = arith.constant dense<0.000000e+00> : vector<16x128xf32>
    %2 = tpu.matmul %0, %1, %cst {dimension_numbers = #tpu.dot_dimension_numbers<[1], [0], [0], [1], [0, 0, 1, 1], [], []>} : vector<16x128xf32>, vector<128x128xf32>, vector<16x128xf32> -> vector<16x128xf32>
    %c0_3 = arith.constant 0 : index
    %c0_4 = arith.constant 0 : index
    %3 = vector.load %arg3[%c0_3, %c0_4] : memref<1x128xf32, #tpu.memory_space<vmem>>, vector<1x128xf32>
    %4 = vector.broadcast %3 : vector<1x128xf32> to vector<16x128xf32>
    %5 = arith.addf %2, %4 : vector<16x128xf32>
    %6 = math.tanh %5 : vector<16x128xf32>
    %c0_5 = arith.constant 0 : index
    %c0_6 = arith.constant 0 : index
    %7 = vector.load %arg4[%c0_5, %c0_6] : memref<128x32xf32, #tpu.memory_space<vmem>>, vector<128x32xf32>
    %cst_7 = arith.constant dense<0.000000e+00> : vector<16x32xf32>
    %8 = tpu.matmul %6, %7, %cst_7 {dimension_numbers = #tpu.dot_dimension_numbers<[1], [0], [0], [1], [0, 0, 1, 1], [], []>} : vector<16x128xf32>, vector<128x32xf32>, vector<16x32xf32> -> vector<16x32xf32>
    %c0_8 = arith.constant 0 : index
    %c0_9 = arith.constant 0 : index
    %9 = vector.load %arg5[%c0_8, %c0_9] : memref<1x32xf32, #tpu.memory_space<vmem>>, vector<1x32xf32>
    %10 = vector.broadcast %9 : vector<1x32xf32> to vector<16x32xf32>
    %11 = arith.addf %8, %10 : vector<16x32xf32>
    %c0_10 = arith.constant 0 : index
    %c0_11 = arith.constant 0 : index
    %12 = vector.load %arg6[%c0_10, %c0_11] : memref<16x32xf32, #tpu.memory_space<vmem>>, vector<16x32xf32>
    tpu.vector_store %arg6[%c0_10, %c0_11], %11 {strides = array<i32>} : memref<16x32xf32, #tpu.memory_space<vmem>>, vector<16x32xf32>,
    return
  }
  func.func @transform_0(%arg0: i32) -> (i32, i32) {
    %c0_i32 = arith.constant 0 : i32
    %c0_i32_0 = arith.constant 0 : i32
    return %arg0, %c0_i32 : i32, i32
  }
  func.func @transform_1(%arg0: i32) -> (i32, i32) {
    %c0_i32 = arith.constant 0 : i32
    %c0_i32_0 = arith.constant 0 : i32
    %c0_i32_1 = arith.constant 0 : i32
    return %c0_i32, %c0_i32_0 : i32, i32
  }
  func.func @transform_2(%arg0: i32) -> (i32, i32) {
    %c0_i32 = arith.constant 0 : i32
    %c0_i32_0 = arith.constant 0 : i32
    %c0_i32_1 = arith.constant 0 : i32
    return %c0_i32, %c0_i32_0 : i32, i32
  }
  func.func @transform_3(%arg0: i32) -> (i32, i32) {
    %c0_i32 = arith.constant 0 : i32
    %c0_i32_0 = arith.constant 0 : i32
    %c0_i32_1 = arith.constant 0 : i32
    return %c0_i32, %c0_i32_0 : i32, i32
  }
  func.func @transform_4(%arg0: i32) -> (i32, i32) {
    %c0_i32 = arith.constant 0 : i32
    %c0_i32_0 = arith.constant 0 : i32
    %c0_i32_1 = arith.constant 0 : i32
    return %c0_i32, %c0_i32_0 : i32, i32
  }
  func.func @transform_5(%arg0: i32) -> (i32, i32) {
    %c0_i32 = arith.constant 0 : i32
    %c0_i32_0 = arith.constant 0 : i32
    return %arg0, %c0_i32 : i32, i32
  }
}

</mosaic_0001>

<llo_original>
// kernel: tpu_custom_call.1
$region0: #{tpu_custom_call.1}
  #allocation0 [shape = 'u32[]', space=smem, size = 0x4, offset = 0x4, fixed_abs, tag = 'smem constant byte address 0x4 - core index']
  #allocation1 [shape = 'u32[144,128]{1,0:T(1,128)}', space=vmem, size = 0x12000, scoped, tag = 'internal scratch']
  %s0 = inlined_call_operand.vmem [shape: f32[129,128], index: 0, kind: input, shape index: {}]
  %s1 = inlined_call_operand.hbm [shape: f32[128,128], index: 1, kind: input, shape index: {}]
  %s2 = inlined_call_operand.vmem [shape: f32[1,128], index: 2, kind: input, shape index: {}]
  %s3 = inlined_call_operand.vmem [shape: f32[128,32], index: 3, kind: input, shape index: {}]
  %s4 = inlined_call_operand.vmem [shape: f32[1,32], index: 4, kind: input, shape index: {}]
  %s5 = inlined_call_operand.vmem [shape: f32[129,32], index: 5, kind: output, shape index: {}]
  %s6 = sld [smem:[#allocation0]]
  $region105: #{tpu_custom_call.1} parent=0
    _
  %s8 = ssub.s32 1, %s6
  %s9 = scalar_select 0, %s8, %s6
  $region1: #{tpu_custom_call.1} parent=0
    #allocation2 [shape = 'u8[65536]{0}', space=vmem, size = 0x10000, scoped, tag = 'input window, operand 1, single buffered']
    #allocation3 [shape = 's32[2]{0}', space=sflag, size = 0x8, scoped, tag = 'scoped memory for tpu_custom_call.1']
    #allocation4 [shape = 'u8[16384]{0}', space=vmem, size = 0x4000, scoped, tag = 'output window, operand 0']
    %10 = vsyncpa [#allocation3], 0
    loop: start=0, step=1, limit=11
    $region2: #{tpu_custom_call.1} parent=1 // loop_pre_header
      _
    $region3: #{tpu_custom_call.1} parent=1 // loop_header
      %s12 = sphi 0, %s16
      %p13 = scmp.ge.s32.totalorder %s12, 11
      %s22 = sphi 0, %s24
      %s25 = sphi 0, %s22
      %s26 = sphi 0, %s25
      %s42 = sphi 0, %s26
      %s46 = sphi 0, %s46
      %s48 = sphi 0, %s46
      %s49 = sphi 0, %s48
      %s63 = sphi 0, %s49
      %s67 = sphi 0, %s67
      %s69 = sphi 0, %s67
      %s70 = sphi 0, %s69
      %s84 = sphi 0, %s70
      %s88 = sphi 0, %s88
      %s90 = sphi 0, %s88
      %s91 = sphi 0, %s90
      %s105 = sphi 0, %s91
      %s109 = sphi 0, %s109
      %s111 = sphi 0, %s109
      %s112 = sphi 0, %s111
      %s126 = sphi 0, %s112
      %s132 = sphi 0, %s134
      %s135 = sphi 0, %s132
      %s136 = sphi 0, %s135
      %s152 = sphi 0, %s136
    $region4: #{tpu_custom_call.1} parent=1 // loop_header_branch
      %15 = sbr.rel (%p13) target = $region8
    $region5: #{tpu_custom_call.1} parent=1 // loop_body
      %s17 = ssub.s32 %s12, 1
      %s18 = ssub.s32 %s12, 2
      %s19 = sadd.s32 %s12, 1
      %s20 = ssub.s32 %s12, %s19
      %p21 = scmp.eq.s32.totalorder %s20, 0
      %s23 = sadd.s32 %s22, 1
      %s24 = scalar_select %p21, %s22, %s23
      %p27 = pneg %p21
      %p28 = scmp.eq.s32.totalorder %s12, 8
      %p29 = por %p27, %p28
      %p30 = scmp.ne.s32.totalorder %s22, %s25
      %p31 = scmp.eq.s32.totalorder %s12, 0
      %p32 = por %p30, %p31
      %p33 = scmp.ne.s32.totalorder %s22, %s25
      %p34 = scmp.eq.s32.totalorder %s17, 8
      %p35 = por %p33, %p34
      %p36 = scmp.ne.s32.totalorder %s25, %s26
      %p37 = scmp.eq.s32.totalorder %s17, 0
      %p38 = por %p36, %p37
      %p39 = scmp.ne.s32.totalorder %s25, %s26
      %p40 = scmp.eq.s32.totalorder %s18, 8
      %p41 = por %p39, %p40
      %p43 = scmp.ne.s32.totalorder %s26, %s42
      %p44 = scmp.eq.s32.totalorder %s18, 0
      %p45 = por %p43, %p44
      %s47 = sadd.s32 %s46, 1
      %p50 = scmp.eq.s32.totalorder %s12, 8
      %p51 = scmp.ne.s32.totalorder %s46, %s48
      %p52 = scmp.eq.s32.totalorder %s12, 0
      %p53 = por %p51, %p52
      %p54 = scmp.ne.s32.totalorder %s46, %s48
      %p55 = scmp.eq.s32.totalorder %s17, 8
      %p56 = por %p54, %p55
      %p57 = scmp.ne.s32.totalorder %s48, %s49
      %p58 = scmp.eq.s32.totalorder %s17, 0
      %p59 = por %p57, %p58
      %p60 = scmp.ne.s32.totalorder %s48, %s49
      %p61 = scmp.eq.s32.totalorder %s18, 8
      %p62 = por %p60, %p61
      %p64 = scmp.ne.s32.totalorder %s49, %s63
      %p65 = scmp.eq.s32.totalorder %s18, 0
      %p66 = por %p64, %p65
      %s68 = sadd.s32 %s67, 1
      %p71 = scmp.eq.s32.totalorder %s12, 8
      %p72 = scmp.ne.s32.totalorder %s67, %s69
      %p73 = scmp.eq.s32.totalorder %s12, 0
      %p74 = por %p72, %p73
      %p75 = scmp.ne.s32.totalorder %s67, %s69
      %p76 = scmp.eq.s32.totalorder %s17, 8
      %p77 = por %p75, %p76
      %p78 = scmp.ne.s32.totalorder %s69, %s70
      %p79 = scmp.eq.s32.totalorder %s17, 0
      %p80 = por %p78, %p79
      %p81 = scmp.ne.s32.totalorder %s69, %s70
      %p82 = scmp.eq.s32.totalorder %s18, 8
      %p83 = por %p81, %p82
      %p85 = scmp.ne.s32.totalorder %s70, %s84
      %p86 = scmp.eq.s32.totalorder %s18, 0
      %p87 = por %p85, %p86
      %s89 = sadd.s32 %s88, 1
      %p92 = scmp.eq.s32.totalorder %s12, 8
      %p93 = scmp.ne.s32.totalorder %s88, %s90
      %p94 = scmp.eq.s32.totalorder %s12, 0
      %p95 = por %p93, %p94
      %p96 = scmp.ne.s32.totalorder %s88, %s90
      %p97 = scmp.eq.s32.totalorder %s17, 8
      %p98 = por %p96, %p97
      %p99 = scmp.ne.s32.totalorder %s90, %s91
      %p100 = scmp.eq.s32.totalorder %s17, 0
      %p101 = por %p99, %p100
      %p102 = scmp.ne.s32.totalorder %s90, %s91
      %p103 = scmp.eq.s32.totalorder %s18, 8
      %p104 = por %p102, %p103
      %p106 = scmp.ne.s32.totalorder %s91, %s105
      %p107 = scmp.eq.s32.totalorder %s18, 0
      %p108 = por %p106, %p107
      %s110 = sadd.s32 %s109, 1
      %p113 = scmp.eq.s32.totalorder %s12, 8
      %p114 = scmp.ne.s32.totalorder %s109, %s111
      %p115 = scmp.eq.s32.totalorder %s12, 0
      %p116 = por %p114, %p115
      %p117 = scmp.ne.s32.totalorder %s109, %s111
      %p118 = scmp.eq.s32.totalorder %s17, 8
      %p119 = por %p117, %p118
      %p120 = scmp.ne.s32.totalorder %s111, %s112
      %p121 = scmp.eq.s32.totalorder %s17, 0
      %p122 = por %p120, %p121
      %p123 = scmp.ne.s32.totalorder %s111, %s112
      %p124 = scmp.eq.s32.totalorder %s18, 8
      %p125 = por %p123, %p124
      %p127 = scmp.ne.s32.totalorder %s112, %s126
      %p128 = scmp.eq.s32.totalorder %s18, 0
      %p129 = por %p127, %p128
      %s130 = ssub.s32 %s12, %s19
      %p131 = scmp.eq.s32.totalorder %s130, 0
      %s133 = sadd.s32 %s132, 1
      %s134 = scalar_select %p131, %s132, %s133
      %p137 = pneg %p131
      %p138 = scmp.eq.s32.totalorder %s12, 8
      %p139 = por %p137, %p138
      %p140 = scmp.ne.s32.totalorder %s132, %s135
      %p141 = scmp.eq.s32.totalorder %s12, 0
      %p142 = por %p140, %p141
      %p143 = scmp.ne.s32.totalorder %s132, %s135
      %p144 = scmp.eq.s32.totalorder %s17, 8
      %p145 = por %p143, %p144
      %p146 = scmp.ne.s32.totalorder %s135, %s136
      %p147 = scmp.eq.s32.totalorder %s17, 0
      %p148 = por %p146, %p147
      %p149 = scmp.ne.s32.totalorder %s135, %s136
      %p150 = scmp.eq.s32.totalorder %s18, 8
      %p151 = por %p149, %p150
      %p153 = scmp.ne.s32.totalorder %s136, %s152
      %p154 = scmp.eq.s32.totalorder %s18, 0
      %p155 = por %p153, %p154
      %p156 = scmp.le.s32.totalorder 1, %s12
      %p157 = scmp.lt.s32.totalorder %s12, 10
      %p158 = pnand %p156, %p157
      %p159 = pneg %p158
      // Predicated region
      $region9: #{tpu_custom_call.1} parent=5 // pred_check
        _
      $region10: #{tpu_custom_call.1} parent=5 // pred_check_branch
        %161 = sbr.rel (%p158) target = $region12
      $region11: #{tpu_custom_call.1} parent=5 // pred_region
        %s162 = ssub.s32 %s12, 1
        // Predicated region
        $region13: #{tpu_custom_call.1} parent=11 // pred_check
          %p163 = pneg %p59
        $region14: #{tpu_custom_call.1} parent=11 // pred_check_branch
          %165 = sbr.rel (%p163) target = $region16
        $region15: #{tpu_custom_call.1} parent=11 // pred_region
          %s167 = ssub.s32 2048, 2048
          %168 = vsyncadd [#allocation3], %s167
          %s169 = sshll.u32 [#allocation2], 4
          %s170 = int_to_ptr.vmem [resolvable:$true] %s169
          %175 = dma.hbm_to_vmem [thread:$0]  %s1, 2048, %s170, [#allocation3], 128, 128, 8
        $region16: #{tpu_custom_call.1} parent=11 // pred_fallthru
          _
        // Predicated region
        $region17: #{tpu_custom_call.1} parent=11 // pred_check
          %p176 = pneg %p80
        $region18: #{tpu_custom_call.1} parent=11 // pred_check_branch
          %178 = sbr.rel (%p176) target = $region20
        $region19: #{tpu_custom_call.1} parent=11 // pred_region
          _
        $region20: #{tpu_custom_call.1} parent=11 // pred_fallthru
          _
        // Predicated region
        $region21: #{tpu_custom_call.1} parent=11 // pred_check
          %p179 = pneg %p101
        $region22: #{tpu_custom_call.1} parent=11 // pred_check_branch
          %181 = sbr.rel (%p179) target = $region24
        $region23: #{tpu_custom_call.1} parent=11 // pred_region
          _
        $region24: #{tpu_custom_call.1} parent=11 // pred_fallthru
          _
        // Predicated region
        $region25: #{tpu_custom_call.1} parent=11 // pred_check
          %p182 = pneg %p122
        $region26: #{tpu_custom_call.1} parent=11 // pred_check_branch
          %184 = sbr.rel (%p182) target = $region28
        $region27: #{tpu_custom_call.1} parent=11 // pred_region
          _
        $region28: #{tpu_custom_call.1} parent=11 // pred_fallthru
          _
      $region12: #{tpu_custom_call.1} parent=5 // pred_fallthru
        _
      %p185 = scmp.lt.s32.totalorder %s12, 9
      // Predicated region
      $region29: #{tpu_custom_call.1} parent=5 // pred_check
        %p186 = pneg %p185
      $region30: #{tpu_custom_call.1} parent=5 // pred_check_branch
        %188 = sbr.rel (%p186) target = $region32
      $region31: #{tpu_custom_call.1} parent=5 // pred_region
        // Predicated region
        $region33: #{tpu_custom_call.1} parent=31 // pred_check
          %p189 = pneg %p32
        $region34: #{tpu_custom_call.1} parent=31 // pred_check_branch
          %191 = sbr.rel (%p189) target = $region36
        $region35: #{tpu_custom_call.1} parent=31 // pred_region
          %s192 = smul.u32 2, %s12
          %s193 = ssub.s32 17, %s192
          %p194 = scmp.lt.s32.totalorder %s193, 2
          %s195 = scalar_select %p194, %s193, 2
          %s196 = smul.u32 128, %s195
          %p197 = scmp.lt.s32.totalorder %s192, 16
          %s198 = scalar_select %p197, %s192, 16
          %s199 = smul.addr %s198, 8
          %s200 = scalar_lea.vmem %s0, %s199
          %s201 = smul.u32 2, %s12
          %s202 = ssub.s32 17, %s201
          %p203 = scmp.lt.s32.totalorder %s202, 2
          %s204 = scalar_select %p203, %s202, 2
          %s205 = smul.u32 128, %s204
        $region36: #{tpu_custom_call.1} parent=31 // pred_fallthru
          _
      $region32: #{tpu_custom_call.1} parent=5 // pred_fallthru
        _
      %p206 = scmp.le.s32.totalorder 1, %s12
      %p207 = scmp.lt.s32.totalorder %s12, 10
      %p208 = pnand %p206, %p207
      %p209 = pneg %p208
      // Predicated region
      $region37: #{tpu_custom_call.1} parent=5 // pred_check
        _
      $region38: #{tpu_custom_call.1} parent=5 // pred_check_branch
        %211 = sbr.rel (%p208) target = $region40
      $region39: #{tpu_custom_call.1} parent=5 // pred_region
        %s212 = ssub.s32 %s12, 1
        // Predicated region
        $region41: #{tpu_custom_call.1} parent=39 // pred_check
          %p213 = pneg %p59
        $region42: #{tpu_custom_call.1} parent=39 // pred_check_branch
          %215 = sbr.rel (%p213) target = $region44
        $region43: #{tpu_custom_call.1} parent=39 // pred_region
          %216 = dma.done [#allocation3], 2048
        $region44: #{tpu_custom_call.1} parent=39 // pred_fallthru
          _
        %s217 = smul.u32 2, %s17
        %s218 = ssub.s32 17, %s217
        %p219 = scmp.lt.s32.totalorder %s218, 2
        %s220 = scalar_select %p219, %s218, 2
        %s221 = smul.u32 128, %s220
        %p222 = scmp.lt.s32.totalorder %s217, 16
        %s223 = scalar_select %p222, %s217, 16
        %s224 = smul.addr %s223, 8
        %s225 = scalar_lea.vmem %s0, %s224
        %p226 = pneg %p38
        %p227 = pneg %p35
        %p228 = pneg %p59
        %p229 = pneg %p56
        %p230 = pneg %p80
        %p231 = pneg %p77
        %p232 = pneg %p101
        %p233 = pneg %p98
        %p234 = pneg %p122
        %p235 = pneg %p119
        %p236 = pneg %p148
        %p237 = pneg %p145
        %s238 = sand.u32 %s135, 1
        %s239 = sand.u32 %s135, 1
        %s240 = smul.addr %s239, 16
        %s241 = scalar_lea.vmem [#allocation4], %s240
        %s242 = smul.u32 2, %s17
        %s243 = ssub.s32 17, %s242
        %p244 = scmp.lt.s32.totalorder %s243, 2
        %s245 = scalar_select %p244, %s243, 2
        %s246 = smul.u32 128, %s245
        %p247 = scmp.lt.s32.totalorder %s242, 16
        %s248 = scalar_select %p247, %s242, 16
        %s249 = smul.addr %s248, 8
        %s250 = scalar_lea.vmem %s0, %s249
        %s251 = smul.u32 2, %s17
        %s252 = ssub.s32 17, %s251
        %p253 = scmp.lt.s32.totalorder %s252, 2
        %s254 = scalar_select %p253, %s252, 2
        %s255 = smul.u32 128, %s254
        %s256 = smul.u32 2, %s17
        %s257 = ssub.s32 17, %s256
        %p258 = scmp.lt.s32.totalorder %s257, 2
        %s259 = scalar_select %p258, %s257, 2
        %s260 = smul.u32 128, %s259
        %v261 = vld [vmem:[%s250] sm:$0xff]
        %v262 = vld [vmem:[%s250 + $0x8] sm:$0xff]
        %v263 = vld [vmem:[#allocation2] sm:$0xff]
        %v264 = vld [vmem:[#allocation2 + $0x8] sm:$0xff]
        %v265 = vld [vmem:[#allocation2 + $0x10] sm:$0xff]
        %v266 = vld [vmem:[#allocation2 + $0x18] sm:$0xff]
        %v267 = vld [vmem:[#allocation2 + $0x20] sm:$0xff]
        %v268 = vld [vmem:[#allocation2 + $0x28] sm:$0xff]
        %v269 = vld [vmem:[#allocation2 + $0x30] sm:$0xff]
        %v270 = vld [vmem:[#allocation2 + $0x38] sm:$0xff]
        %v271 = vld [vmem:[#allocation2 + $0x40] sm:$0xff]
        %v272 = vld [vmem:[#allocation2 + $0x48] sm:$0xff]
        %v273 = vld [vmem:[#allocation2 + $0x50] sm:$0xff]
        %v274 = vld [vmem:[#allocation2 + $0x58] sm:$0xff]
        %v275 = vld [vmem:[#allocation2 + $0x60] sm:$0xff]
        %v276 = vld [vmem:[#allocation2 + $0x68] sm:$0xff]
        %v277 = vld [vmem:[#allocation2 + $0x70] sm:$0xff]
        %v278 = vld [vmem:[#allocation2 + $0x78] sm:$0xff]
        %v279 = vld [vmem:[%s2] sm:$0x1]
        %v281 = vlaneseq
        %v282 = vshrl.u32 %v281, 7
        %v283 = vsub.s32 0, %v282
        %v284 = vrot.slane %v279, %v283
        %286 = vmatprep.subr.mxu0 0.0
        %287 = vmatpush1.msra.mxu0 %v263
        %288 = vmatprep.subr.mxu0 0.0
        %289 = vmatpush1.msra.mxu0 %v264
        %290 = vmatprep.subr.mxu0 0.0
        %291 = vmatpush1.msra.mxu0 %v265
        %292 = vmatprep.subr.mxu0 0.0
        %293 = vmatpush1.msra.mxu0 %v266
        %294 = vmatprep.subr.mxu0 0.0
        %295 = vmatpush1.msra.mxu0 %v267
        %296 = vmatprep.subr.mxu0 0.0
        %297 = vmatpush1.msra.mxu0 %v268
        %298 = vmatprep.subr.mxu0 0.0
        %299 = vmatpush1.msra.mxu0 %v269
        %300 = vmatprep.subr.mxu0 0.0
        %301 = vmatpush1.msra.mxu0 %v270
        %302 = vmatprep.subr.mxu0 0.0
        %303 = vmatpush1.msra.mxu0 %v271
        %304 = vmatprep.subr.mxu0 0.0
        %305 = vmatpush1.msra.mxu0 %v272
        %306 = vmatprep.subr.mxu0 0.0
        %307 = vmatpush1.msra.mxu0 %v273
        %308 = vmatprep.subr.mxu0 0.0
        %309 = vmatpush1.msra.mxu0 %v274
        %310 = vmatprep.subr.mxu0 0.0
        %311 = vmatpush1.msra.mxu0 %v275
        %312 = vmatprep.subr.mxu0 0.0
        %313 = vmatpush1.msra.mxu0 %v276
        %314 = vmatprep.subr.mxu0 0.0
        %315 = vmatpush1.msra.mxu0 %v277
        %316 = vmatprep.subr.mxu0 0.0
        %317 = vmatpush1.msra.mxu0 %v278
        %318 = vmatprep.subr.mxu0 0.0
        %319 = vmatpush1.msra.mxu0 0.0
        %320 = vmatprep.subr.mxu0 0.0
        %321 = vmatpush1.msra.mxu0 0.0
        %322 = vmatprep.subr.mxu0 0.0
        %323 = vmatpush1.msra.mxu0 0.0
        %324 = vmatprep.subr.mxu0 0.0
        %325 = vmatpush1.msra.mxu0 0.0
        %326 = vmatprep.subr.mxu0 0.0
        %327 = vmatpush1.msra.mxu0 0.0
        %328 = vmatprep.subr.mxu0 0.0
        %329 = vmatpush1.msra.mxu0 0.0
        %330 = vmatprep.subr.mxu0 0.0
        %331 = vmatpush1.msra.mxu0 0.0
        %332 = vmatprep.subr.mxu0 0.0
        %333 = vmatpush1.msra.mxu0 0.0
        %334 = vmatprep.subr.mxu0 0.0
        %335 = vmatpush1.msra.mxu0 0.0
        %336 = vmatprep.subr.mxu0 0.0
        %337 = vmatpush1.msra.mxu0 0.0
        %338 = vmatprep.subr.mxu0 0.0
        %339 = vmatpush1.msra.mxu0 0.0
        %340 = vmatprep.subr.mxu0 0.0
        %341 = vmatpush1.msra.mxu0 0.0
        %342 = vmatprep.subr.mxu0 0.0
        %343 = vmatpush1.msra.mxu0 0.0
        %344 = vmatprep.subr.mxu0 0.0
        %345 = vmatpush1.msra.mxu0 0.0
        %346 = vmatprep.subr.mxu0 0.0
        %347 = vmatpush1.msra.mxu0 0.0
        %348 = vmatprep.subr.mxu0 0.0
        %349 = vmatpush1.msra.mxu0 0.0
        %350 = vmatprep.mubr.f32.mxu0 0.0
        %351 = vmatmul.mubr.f32.gmra.mrb[0].mxu0 %v261
        %v352 = vpop.f32.mrb[0].mxu0
        %v353 = vadd.f32 %v284, %v352
        %v354 = vpop.f32.mrb[0].mxu0
        %355 = vmatprep.mubr.f32.mxu0 0.0
        %356 = vmatmul.mubr.f32.gmra.mrb[0].mxu0 %v262
        %v357 = vpop.f32.mrb[0].mxu0
        %v358 = vadd.f32 %v284, %v357
        %v359 = vpop.f32.mrb[0].mxu0
        %360 = vdwg.mxu0
        %v361 = vtanh.pop %v353
        %v362 = vtanh.pop %v358
        %v363 = vld [vmem:[%s3] sm:$0xff]
        %v364 = vld [vmem:[%s3 + $0x8] sm:$0xff]
        %v365 = vld [vmem:[%s3 + $0x10] sm:$0xff]
        %v366 = vld [vmem:[%s3 + $0x18] sm:$0xff]
        %v367 = vld [vmem:[%s3 + $0x20] sm:$0xff]
        %v368 = vld [vmem:[%s3 + $0x28] sm:$0xff]
        %v369 = vld [vmem:[%s3 + $0x30] sm:$0xff]
        %v370 = vld [vmem:[%s3 + $0x38] sm:$0xff]
        %v371 = vld [vmem:[%s3 + $0x40] sm:$0xff]
        %v372 = vld [vmem:[%s3 + $0x48] sm:$0xff]
        %v373 = vld [vmem:[%s3 + $0x50] sm:$0xff]
        %v374 = vld [vmem:[%s3 + $0x58] sm:$0xff]
        %v375 = vld [vmem:[%s3 + $0x60] sm:$0xff]
        %v376 = vld [vmem:[%s3 + $0x68] sm:$0xff]
        %v377 = vld [vmem:[%s3 + $0x70] sm:$0xff]
        %v378 = vld [vmem:[%s3 + $0x78] sm:$0xff]
        %v379 = vld [vmem:[%s4] sm:$0x1]
        %v381 = vlaneseq
        %v382 = vshrl.u32 %v381, 7
        %v383 = vsub.s32 0, %v382
        %v384 = vrot.slane %v379, %v383
        %386 = vmatprep.subr.mxu0 0.0
        %387 = vmatpush1.msra.mxu0 %v363
        %388 = vmatprep.subr.mxu0 0.0
        %389 = vmatpush1.msra.mxu0 %v364
        %390 = vmatprep.subr.mxu0 0.0
        %391 = vmatpush1.msra.mxu0 %v365
        %392 = vmatprep.subr.mxu0 0.0
        %393 = vmatpush1.msra.mxu0 %v366
        %394 = vmatprep.subr.mxu0 0.0
        %395 = vmatpush1.msra.mxu0 %v367
        %396 = vmatprep.subr.mxu0 0.0
        %397 = vmatpush1.msra.mxu0 %v368
        %398 = vmatprep.subr.mxu0 0.0
        %399 = vmatpush1.msra.mxu0 %v369
        %400 = vmatprep.subr.mxu0 0.0
        %401 = vmatpush1.msra.mxu0 %v370
        %402 = vmatprep.subr.mxu0 0.0
        %403 = vmatpush1.msra.mxu0 %v371
        %404 = vmatprep.subr.mxu0 0.0
        %405 = vmatpush1.msra.mxu0 %v372
        %406 = vmatprep.subr.mxu0 0.0
        %407 = vmatpush1.msra.mxu0 %v373
        %408 = vmatprep.subr.mxu0 0.0
        %409 = vmatpush1.msra.mxu0 %v374
        %410 = vmatprep.subr.mxu0 0.0
        %411 = vmatpush1.msra.mxu0 %v375
        %412 = vmatprep.subr.mxu0 0.0
        %413 = vmatpush1.msra.mxu0 %v376
        %414 = vmatprep.subr.mxu0 0.0
        %415 = vmatpush1.msra.mxu0 %v377
        %416 = vmatprep.subr.mxu0 0.0
        %417 = vmatpush1.msra.mxu0 %v378
        %418 = vmatprep.subr.mxu0 0.0
        %419 = vmatpush1.msra.mxu0 0.0
        %420 = vmatprep.subr.mxu0 0.0
        %421 = vmatpush1.msra.mxu0 0.0
        %422 = vmatprep.subr.mxu0 0.0
        %423 = vmatpush1.msra.mxu0 0.0
        %424 = vmatprep.subr.mxu0 0.0
        %425 = vmatpush1.msra.mxu0 0.0
        %426 = vmatprep.subr.mxu0 0.0
        %427 = vmatpush1.msra.mxu0 0.0
        %428 = vmatprep.subr.mxu0 0.0
        %429 = vmatpush1.msra.mxu0 0.0
        %430 = vmatprep.subr.mxu0 0.0
        %431 = vmatpush1.msra.mxu0 0.0
        %432 = vmatprep.subr.mxu0 0.0
        %433 = vmatpush1.msra.mxu0 0.0
        %434 = vmatprep.subr.mxu0 0.0
        %435 = vmatpush1.msra.mxu0 0.0
        %436 = vmatprep.subr.mxu0 0.0
        %437 = vmatpush1.msra.mxu0 0.0
        %438 = vmatprep.subr.mxu0 0.0
        %439 = vmatpush1.msra.mxu0 0.0
        %440 = vmatprep.subr.mxu0 0.0
        %441 = vmatpush1.msra.mxu0 0.0
        %442 = vmatprep.subr.mxu0 0.0
        %443 = vmatpush1.msra.mxu0 0.0
        %444 = vmatprep.subr.mxu0 0.0
        %445 = vmatpush1.msra.mxu0 0.0
        %446 = vmatprep.subr.mxu0 0.0
        %447 = vmatpush1.msra.mxu0 0.0
        %448 = vmatprep.subr.mxu0 0.0
        %449 = vmatpush1.msra.mxu0 0.0
        %450 = vmatprep.mubr.f32.mxu0 0.0
        %451 = vmatmul.mubr.f32.gmra.mrb[0].mxu0 %v361
        %v452 = vpop.f32.mrb[0].mxu0
        %v453 = vadd.f32 %v384, %v452
        %v454 = vpop.f32.mrb[0].mxu0
        %455 = vmatprep.mubr.f32.mxu0 0.0
        %456 = vmatmul.mubr.f32.gmra.mrb[0].mxu0 %v362
        %v457 = vpop.f32.mrb[0].mxu0
        %v458 = vadd.f32 %v384, %v457
        %v459 = vpop.f32.mrb[0].mxu0
        %460 = vdwg.mxu0
        %vm461 = vcmask 261120
        %462 = vst.msk [vmem:[%s241] sm:$0xff] %vm461, %v453
        %463 = vst.msk [vmem:[%s241 + $0x8] sm:$0xff] %vm461, %v458
        %s464 = sand.u32 %s135, 1
        %s465 = sand.u32 %s135, 1
        %s466 = smul.addr %s465, 16
        %s467 = scalar_lea.vmem [#allocation4], %s466
        // Predicated region
        $region45: #{tpu_custom_call.1} parent=39 // pred_check
          %p468 = pneg %p145
        $region46: #{tpu_custom_call.1} parent=39 // pred_check_branch
          %470 = sbr.rel (%p468) target = $region48
        $region47: #{tpu_custom_call.1} parent=39 // pred_region
          %s471 = smul.u32 2, %s17
          %s472 = ssub.s32 17, %s471
          %p473 = scmp.lt.s32.totalorder %s472, 2
          %s474 = scalar_select %p473, %s472, 2
          %s475 = smul.u32 128, %s474
          %p476 = scmp.ne.s32.totalorder 0, %s475
          %s477 = smul.addr %s471, 8
          %s478 = scalar_lea.vmem %s5, %s477
          // Predicated region
          $region49: #{tpu_custom_call.1} parent=47 // pred_check
            %p479 = pneg %p476
          $region50: #{tpu_custom_call.1} parent=47 // pred_check_branch
            %481 = sbr.rel (%p479) target = $region52
          $region51: #{tpu_custom_call.1} parent=47 // pred_region
            // Predicated region
            $region53: #{tpu_custom_call.1} parent=51 // pred_check
              _
            $region54: #{tpu_custom_call.1} parent=51 // pred_check_branch
              %483 = sbr.rel (0) target = $region56
            $region55: #{tpu_custom_call.1} parent=51 // pred_region
              // Predicated region
              $region75: #{tpu_custom_call.1} parent=55 // pred_check
                _
              $region76: #{tpu_custom_call.1} parent=55 // pred_check_branch
                %534 = sbr.rel (0) target = $region78
              $region77: #{tpu_custom_call.1} parent=55 // pred_region
                %s535 = sshrl.u32 %s474, 1
                // While loop
                $region79: #{tpu_custom_call.1} parent=77 // loop_pre_header
                  _
                $region80: #{tpu_custom_call.1} parent=77 // loop_header
                  %s537 = sphi 0, %s539
                  %p538 = scmp.ge.s32.totalorder %s537, %s535
                  %s542 = sphi 0, %s551
                  %s543 = sphi %s467, %s554
                  %s544 = sphi %s478, %s555
                $region81: #{tpu_custom_call.1} parent=77 // loop_header_branch
                  %541 = sbr.rel (%p538) target = $region85
                $region82: #{tpu_custom_call.1} parent=77 // loop_body
                  %v545 = vld [vmem:[%s543] sm:$0xff]
                  %546 = vst [vmem:[%s544] sm:$0xff] %v545
                  %v547 = vld [vmem:[%s543 + $0x8] sm:$0xff]
                  %548 = vst [vmem:[%s544 + $0x8] sm:$0xff] %v547
                  %s549 = sadd.s32 1, %s542
                  %p550 = scmp.ge.s32.totalorder %s549, %s535
                  %s551 = scalar_select %p550, 0, %s549
                  %s552 = smul.u32 %s551, 16
                  %s553 = smul.u32 %s551, 16
                  %s554 = scalar_lea.vmem %s467, %s552 [#allocation4]
                  %s555 = scalar_lea.vmem %s478, %s553
                $region83: #{tpu_custom_call.1} parent=77 // loop_footer
                  %s539 = sadd.s32 %s537, 1
                $region84: #{tpu_custom_call.1} parent=77 // loop_footer_branch
                  %536 = sbr.rel target = $region80
                $region85: #{tpu_custom_call.1} parent=77 // loop_exit
                  _
                %s556 = sshrl.u32 %s474, 1
                %s557 = sand.u32 %s474, 1
                %s558 = smul.u32 %s556, 2
                %s559 = smul.u32 8, %s558
                %s560 = scalar_lea.vmem %s467, %s559 [#allocation4]
                %s561 = smul.u32 8, %s558
                %s562 = scalar_lea.vmem %s478, %s561
                // While loop
                $region86: #{tpu_custom_call.1} parent=77 // loop_pre_header
                  _
                $region87: #{tpu_custom_call.1} parent=77 // loop_header
                  %s564 = sphi 0, %s566
                  %p565 = scmp.ge.s32.totalorder %s564, %s557
                  %s569 = sphi 0, %s576
                  %s570 = sphi %s560, %s579
                  %s571 = sphi %s562, %s580
                $region88: #{tpu_custom_call.1} parent=77 // loop_header_branch
                  %568 = sbr.rel (%p565) target = $region92
                $region89: #{tpu_custom_call.1} parent=77 // loop_body
                  %v572 = vld [vmem:[%s570] sm:$0xff]
                  %573 = vst [vmem:[%s571] sm:$0xff] %v572
                  %s574 = sadd.s32 1, %s569
                  %p575 = scmp.ge.s32.totalorder %s574, %s557
                  %s576 = scalar_select %p575, 0, %s574
                  %s577 = smul.u32 %s576, 8
                  %s578 = smul.u32 %s576, 8
                  %s579 = scalar_lea.vmem %s560, %s577 [#allocation4]
                  %s580 = scalar_lea.vmem %s562, %s578
                $region90: #{tpu_custom_call.1} parent=77 // loop_footer
                  %s566 = sadd.s32 %s564, 1
                $region91: #{tpu_custom_call.1} parent=77 // loop_footer_branch
                  %563 = sbr.rel target = $region87
                $region92: #{tpu_custom_call.1} parent=77 // loop_exit
                  _
              $region78: #{tpu_custom_call.1} parent=55 // pred_fallthru
                _
              // Predicated region
              $region93: #{tpu_custom_call.1} parent=55 // pred_check
                _
              $region94: #{tpu_custom_call.1} parent=55 // pred_check_branch
                %582 = sbr.rel target = $region96
              $region95: #{tpu_custom_call.1} parent=55 // pred_region
                _
              $region96: #{tpu_custom_call.1} parent=55 // pred_fallthru
                _
            $region56: #{tpu_custom_call.1} parent=51 // pred_fallthru
              _
            // Predicated region
            $region57: #{tpu_custom_call.1} parent=51 // pred_check
              _
            $region58: #{tpu_custom_call.1} parent=51 // pred_check_branch
              %485 = sbr.rel target = $region60
            $region59: #{tpu_custom_call.1} parent=51 // pred_region
              %s487 = sshrl.u32 %s474, 1
              // While loop
              $region61: #{tpu_custom_call.1} parent=59 // loop_pre_header
                _
              $region62: #{tpu_custom_call.1} parent=59 // loop_header
                %s489 = sphi 0, %s491
                %p490 = scmp.ge.s32.totalorder %s489, %s487
                %s494 = sphi 0, %s503
                %s495 = sphi %s467, %s506
                %s496 = sphi %s478, %s507
              $region63: #{tpu_custom_call.1} parent=59 // loop_header_branch
                %493 = sbr.rel (%p490) target = $region67
              $region64: #{tpu_custom_call.1} parent=59 // loop_body
                %v497 = vld [vmem:[%s495] sm:$0xff]
                %498 = vst [vmem:[%s496] sm:$0xff] %v497
                %v499 = vld [vmem:[%s495 + $0x8] sm:$0xff]
                %500 = vst [vmem:[%s496 + $0x8] sm:$0xff] %v499
                %s501 = sadd.s32 1, %s494
                %p502 = scmp.ge.s32.totalorder %s501, %s487
                %s503 = scalar_select %p502, 0, %s501
                %s504 = smul.u32 %s503, 16
                %s505 = smul.u32 %s503, 16
                %s506 = scalar_lea.vmem %s467, %s504 [#allocation4]
                %s507 = scalar_lea.vmem %s478, %s505
              $region65: #{tpu_custom_call.1} parent=59 // loop_footer
                %s491 = sadd.s32 %s489, 1
              $region66: #{tpu_custom_call.1} parent=59 // loop_footer_branch
                %488 = sbr.rel target = $region62
              $region67: #{tpu_custom_call.1} parent=59 // loop_exit
                _
              %s508 = sshrl.u32 %s474, 1
              %s509 = sand.u32 %s474, 1
              %s510 = smul.u32 %s508, 2
              %s511 = smul.u32 8, %s510
              %s512 = scalar_lea.vmem %s467, %s511 [#allocation4]
              %s513 = smul.u32 8, %s510
              %s514 = scalar_lea.vmem %s478, %s513
              // While loop
              $region68: #{tpu_custom_call.1} parent=59 // loop_pre_header
                _
              $region69: #{tpu_custom_call.1} parent=59 // loop_header
                %s516 = sphi 0, %s518
                %p517 = scmp.ge.s32.totalorder %s516, %s509
                %s521 = sphi 0, %s528
                %s522 = sphi %s512, %s531
                %s523 = sphi %s514, %s532
              $region70: #{tpu_custom_call.1} parent=59 // loop_header_branch
                %520 = sbr.rel (%p517) target = $region74
              $region71: #{tpu_custom_call.1} parent=59 // loop_body
                %v524 = vld [vmem:[%s522] sm:$0xff]
                %525 = vst [vmem:[%s523] sm:$0xff] %v524
                %s526 = sadd.s32 1, %s521
                %p527 = scmp.ge.s32.totalorder %s526, %s509
                %s528 = scalar_select %p527, 0, %s526
                %s529 = smul.u32 %s528, 8
                %s530 = smul.u32 %s528, 8
                %s531 = scalar_lea.vmem %s512, %s529 [#allocation4]
                %s532 = scalar_lea.vmem %s514, %s530
              $region72: #{tpu_custom_call.1} parent=59 // loop_footer
                %s518 = sadd.s32 %s516, 1
              $region73: #{tpu_custom_call.1} parent=59 // loop_footer_branch
                %515 = sbr.rel target = $region69
              $region74: #{tpu_custom_call.1} parent=59 // loop_exit
                _
            $region60: #{tpu_custom_call.1} parent=51 // pred_fallthru
              _
          $region52: #{tpu_custom_call.1} parent=47 // pred_fallthru
            _
          %583 = vnop
        $region48: #{tpu_custom_call.1} parent=39 // pred_fallthru
          _
      $region40: #{tpu_custom_call.1} parent=5 // pred_fallthru
        _
      %p584 = scmp.le.s32.totalorder 2, %s12
      // Predicated region
      $region97: #{tpu_custom_call.1} parent=5 // pred_check
        %p585 = pneg %p584
      $region98: #{tpu_custom_call.1} parent=5 // pred_check_branch
        %587 = sbr.rel (%p585) target = $region100
      $region99: #{tpu_custom_call.1} parent=5 // pred_region
        %s588 = ssub.s32 %s12, 2
        // Predicated region
        $region101: #{tpu_custom_call.1} parent=99 // pred_check
          %p589 = pneg %p151
        $region102: #{tpu_custom_call.1} parent=99 // pred_check_branch
          %591 = sbr.rel (%p589) target = $region104
        $region103: #{tpu_custom_call.1} parent=99 // pred_region
          %s592 = sand.u32 %s136, 1
          %s593 = sand.u32 %s136, 1
          %s594 = smul.addr %s593, 16
          %s595 = scalar_lea.vmem [#allocation4], %s594
        $region104: #{tpu_custom_call.1} parent=99 // pred_fallthru
          _
      $region100: #{tpu_custom_call.1} parent=5 // pred_fallthru
        _
    $region6: #{tpu_custom_call.1} parent=1 // loop_footer
      %s16 = sadd.s32 1, %s12
    $region7: #{tpu_custom_call.1} parent=1 // loop_footer_branch
      %11 = sbr.rel target = $region3
    $region8: #{tpu_custom_call.1} parent=1 // loop_exit
      _
    %596 = vsyncpa [#allocation3], 1
    %s597 = scalar_lea.sflag [#allocation3], 1
    %598 = vsyncpa %s597, 1

</llo_original>
